<compile_context>
chip_gen: v7x
topology: tpu7x:2x2x1
jax: 0.10.0
libtpu: 0.0.40
codegen_flags: <defaults>
</compile_context>

<pallas_src>
import functools

import jax
import jax.numpy as jnp
from jax.experimental import pallas as pl
from jax.experimental.pallas import tpu as pltpu


# ---------------------------------------------------------------------------
# helpers
# ---------------------------------------------------------------------------

def _round_up(x, m):
    return ((x + m - 1) // m) * m


def _sublane_multiple(dtype):
    # f32 -> 8 sublanes, bf16 -> 16, int8/fp8 -> 32
    return max(8, 32 // jnp.dtype(dtype).itemsize)


def _tpu_vmem_bytes():
    try:
        return int(pltpu.get_tpu_info().vmem_capacity_bytes)
    except Exception:
        return 64 << 20          # conservative: assume v7x-sized VMEM


_VMEM_PHYS = _tpu_vmem_bytes()
_SMALL_VMEM = _VMEM_PHYS <= (64 << 20)                # v7x-like: 64 MiB, 2 TCs
_VMEM_CAP = max(int(_VMEM_PHYS * 0.8), 32 << 20)      # usable budget w/ headroom
_VMEM_FLOOR = min(16 << 20, _VMEM_CAP)


def _choose_tile_m(m, compute_dtype, *, fallback=False):
    """Pick an M tile (multiple of sublane packing) and the padded M extent."""
    sub = _sublane_multiple(compute_dtype)
    m_pad = _round_up(max(int(m), 1), sub)
    if fallback:
        # HBM-bound weight streaming: bigger M tiles cut weight re-reads.
        cap = 512 if _SMALL_VMEM else 1024
    else:
        cap = 256 if _SMALL_VMEM else 512
    if m_pad <= cap:
        if _SMALL_VMEM and not fallback and m_pad >= 256:
            # v7x has two TensorCores: give the "parallel" M axis >= 2 steps.
            tile_m = _round_up((m_pad + 1) // 2, sub)
        else:
            tile_m = m_pad
    else:
        tile_m = cap
    m_pad = _round_up(m_pad, tile_m)
    return tile_m, m_pad


# ---------------------------------------------------------------------------
# fused whole-MLP kernel (weights resident in VMEM, tile over batch only)
# ---------------------------------------------------------------------------

def _fused_mlp_kernel(x_ref, *refs, activations):
    o_ref = refs[-1]
    wb_refs = refs[:-1]
    n_layers = len(activations)
    h = x_ref[...]                               # (tile_m, in_pad), compute dtype
    for i, act in enumerate(activations):
        w = wb_refs[2 * i][...]                  # (in_pad, out_pad), compute dtype
        b = wb_refs[2 * i + 1][...]              # (1, out_pad), f32
        y = jnp.dot(h, w, preferred_element_type=jnp.float32) + b   # f32 epilogue
        if act == "relu":
            y = jnp.maximum(y, 0.0)
        elif act == "sigmoid":
            y = jax.nn.sigmoid(y)
        if i + 1 < n_layers:
            # Early downcast: ends the f32 temporary's live range before the
            # next layer's matmul (halves peak intermediate footprint).
            h = y.astype(w.dtype)
        else:
            o_ref[...] = y.astype(o_ref.dtype)


def _fused_mlp_call(x_pad, weights, biases, activations, *, tile_m, out_dtype,
                    vmem_limit_bytes, cost):
    m_pad, d0 = x_pad.shape
    d_last = weights[-1].shape[1]

    in_specs = [pl.BlockSpec((tile_m, d0), lambda i: (i, 0))]
    args = [x_pad]
    for w, b in zip(weights, biases):
        in_specs.append(pl.BlockSpec(w.shape, lambda i: (0, 0)))   # resident weight
        in_specs.append(pl.BlockSpec(b.shape, lambda i: (0, 0)))   # resident bias
        args.append(w)
        args.append(b)

    kernel = functools.partial(_fused_mlp_kernel, activations=tuple(activations))
    return pl.pallas_call(
        kernel,
        out_shape=jax.ShapeDtypeStruct((m_pad, d_last), out_dtype),
        grid_spec=pltpu.PrefetchScalarGridSpec(
            num_scalar_prefetch=0,
            grid=(m_pad // tile_m,),
            in_specs=in_specs,
            out_specs=pl.BlockSpec((tile_m, d_last), lambda i: (i, 0)),
        ),
        compiler_params=pltpu.CompilerParams(
            dimension_semantics=("parallel",),
            vmem_limit_bytes=int(vmem_limit_bytes)),
        cost_estimate=cost,
    )(*args)


# ---------------------------------------------------------------------------
# fallback: per-layer M/N/K-tiled linear (weights too big to stay resident)
# ---------------------------------------------------------------------------

def _linear_tiled_kernel(x_ref, w_ref, b_ref, o_ref, acc_ref, *, activation):
    k = pl.program_id(2)

    @pl.when(k == 0)
    def _():
        # Seed accumulator with the bias -> no separate bias add in the epilogue.
        acc_ref[...] = jnp.broadcast_to(b_ref[...].astype(jnp.float32),
                                        acc_ref.shape)

    acc_ref[...] += jnp.dot(x_ref[...], w_ref[...],
                            preferred_element_type=jnp.float32)

    @pl.when(k == pl.num_programs(2) - 1)
    def _():
        y = acc_ref[...]
        if activation == "relu":
            y = jnp.maximum(y, 0.0)
        elif activation == "sigmoid":
            y = jax.nn.sigmoid(y)
        o_ref[...] = y.astype(o_ref.dtype)


def _tiled_linear_call(x_pad, w_pad, b_pad, activation, *, tile_m, out_dtype):
    m_pad, k_pad = x_pad.shape
    k_w, n_pad = w_pad.shape
    assert k_pad == k_w

    if _SMALL_VMEM:
        # v7x: 2x256^2 MXU, 64 MiB VMEM -> 256-lane N tiles
        tn = 256 if n_pad % 256 == 0 else 128
    else:
        # 128-MiB parts: bigger N tiles are fine and cut per-step overhead
        tn = 512 if n_pad % 512 == 0 else (256 if n_pad % 256 == 0 else 128)
    tk = 512 if k_pad % 512 == 0 else (256 if k_pad % 256 == 0 else 128)

    x_isz = x_pad.dtype.itemsize
    w_isz = w_pad.dtype.itemsize
    o_isz = jnp.dtype(out_dtype).itemsize
    vmem = (2 * tile_m * tk * x_isz          # double-buffered x tiles
            + 2 * tk * tn * w_isz            # double-buffered w tiles
            + 2 * tile_m * tn * o_isz        # double-buffered out tiles
            + tile_m * tn * 4                # f32 accumulator
            + 2 * tn * 4                     # bias
            + (2 << 20))                     # slack
    vmem = max(min(int(vmem), _VMEM_CAP), _VMEM_FLOOR)

    m_tiles = m_pad // tile_m
    n_tiles = n_pad // tn
    cost = pl.CostEstimate(
        flops=2 * m_pad * k_pad * n_pad,
        transcendentals=m_pad * n_pad if activation == "sigmoid" else 0,
        bytes_accessed=(m_pad * k_pad * x_isz * n_tiles      # x re-read per N tile
                        + k_pad * n_pad * w_isz * m_tiles    # w re-read per M tile
                        + n_pad * 4 * m_tiles
                        + m_pad * n_pad * o_isz))

    kernel = functools.partial(_linear_tiled_kernel, activation=activation)
    return pl.pallas_call(
        kernel,
        out_shape=jax.ShapeDtypeStruct((m_pad, n_pad), out_dtype),
        grid_spec=pltpu.PrefetchScalarGridSpec(
            num_scalar_prefetch=0,
            grid=(m_pad // tile_m, n_pad // tn, k_pad // tk),
            in_specs=[
                pl.BlockSpec((tile_m, tk), lambda i, j, k: (i, k)),
                pl.BlockSpec((tk, tn), lambda i, j, k: (k, j)),
                pl.BlockSpec((1, tn), lambda i, j, k: (0, j)),
            ],
            out_specs=pl.BlockSpec((tile_m, tn), lambda i, j, k: (i, j)),
            scratch_shapes=[pltpu.VMEM((tile_m, tn), jnp.float32)],
        ),
        compiler_params=pltpu.CompilerParams(
            dimension_semantics=("parallel", "parallel", "arbitrary"),
            vmem_limit_bytes=vmem),
        cost_estimate=cost,
    )(x_pad, w_pad, b_pad)


# ---------------------------------------------------------------------------
# module
# ---------------------------------------------------------------------------

class PallasMLP:
    """JAX/Pallas mirror of the PyTorch MLP module."""

    def __init__(self, input_dim, hidden_dim, output_dim, num_layers,
                 sigmoid_output=False, key=None, param_dtype=jnp.float32,
                 compute_dtype=jnp.bfloat16, force_tiled=False):
        # compute_dtype=bf16 is MXU-native on all generations (f32 accumulation
        # is always used inside the kernels); pass jnp.float32 for bit-tight
        # agreement with an f32 reference.
        self.num_layers = num_layers
        self.sigmoid_output = sigmoid_output
        self.output_dim = output_dim
        self.compute_dtype = jnp.dtype(compute_dtype)
        self.force_tiled = force_tiled

        h = [hidden_dim] * (num_layers - 1)
        dims = list(zip([input_dim] + h, h + [output_dim]))

        if key is None:
            key = jax.random.PRNGKey(0)

        self.params = []      # PyTorch-layout (out, in) weights + (out,) biases
        self.weights_p = []   # pre-transposed, zero-padded (in_pad, out_pad)
        self.biases_p = []    # zero-padded (1, out_pad) f32
        for (n_in, n_out) in dims:
            key, kw, kb = jax.random.split(key, 3)
            bound = 1.0 / (n_in ** 0.5)   # mimic nn.Linear default init
            w = jax.random.uniform(kw, (n_out, n_in), param_dtype, -bound, bound)
            b = jax.random.uniform(kb, (n_out,), param_dtype, -bound, bound)
            self.params.append((w, b))

            in_p, out_p = _round_up(n_in, 128), _round_up(n_out, 128)
            w_t = jnp.zeros((in_p, out_p), self.compute_dtype)
            w_t = w_t.at[:n_in, :n_out].set(w.T.astype(self.compute_dtype))
            b_p = jnp.zeros((1, out_p), jnp.float32)
            b_p = b_p.at[0, :n_out].set(b.astype(jnp.float32))
            self.weights_p.append(w_t)
            self.biases_p.append(b_p)

        self.activations = []
        for i in range(num_layers):
            if i < num_layers - 1:
                self.activations.append("relu")
            elif sigmoid_output:
                self.activations.append("sigmoid")
            else:
                self.activations.append("none")

        self._weight_bytes = sum(int(w.size) * w.dtype.itemsize
                                 for w in self.weights_p)
        self._bias_bytes = sum(int(b.size) * b.dtype.itemsize
                               for b in self.biases_p)

    def _fused_vmem_needed(self, tile_m, d_in_pad, d_out_pad, o_isz):
        """Fused-path VMEM requirement.  Resident weights/biases are counted
        TWICE: default BlockSpec pipelining double-buffers every input."""
        c_isz = self.compute_dtype.itemsize
        max_out_pad = max(w.shape[1] for w in self.weights_p)
        return (2 * (self._weight_bytes + self._bias_bytes)
                + 2 * tile_m * d_in_pad * c_isz       # double-buffered x tiles
                + 2 * tile_m * d_out_pad * o_isz      # double-buffered out tiles
                + 3 * tile_m * max_out_pad * 4        # f32 layer temporaries
                + (2 << 20))                          # slack

    def __call__(self, x):
        lead = x.shape[:-1]
        x2 = x.reshape(-1, x.shape[-1])
        m, d_in = x2.shape
        d_in_pad = self.weights_p[0].shape[0]
        d_out_pad = self.weights_p[-1].shape[1]
        out_dtype = x.dtype
        o_isz = jnp.dtype(out_dtype).itemsize
        c_isz = self.compute_dtype.itemsize

        tile_m, m_pad = _choose_tile_m(m, self.compute_dtype)
        fused_need = self._fused_vmem_needed(tile_m, d_in_pad, d_out_pad, o_isz)
        use_fused = (not self.force_tiled) and fused_need <= _VMEM_CAP
        if not use_fused:
            tile_m, m_pad = _choose_tile_m(m, self.compute_dtype, fallback=True)

        # Pad/cast the input only when shapes are not already aligned.
        if m_pad == m and d_in == d_in_pad:
            x_pad = x2.astype(self.compute_dtype)
        else:
            x_pad = jnp.zeros((m_pad, d_in_pad), self.compute_dtype)
            x_pad = x_pad.at[:m, :d_in].set(x2.astype(self.compute_dtype))

        if use_fused:
            vmem = max(min(int(fused_need), _VMEM_CAP), _VMEM_FLOOR)
            cost = pl.CostEstimate(
                flops=2 * m_pad * sum(w.shape[0] * w.shape[1]
                                      for w in self.weights_p),
                transcendentals=m_pad * d_out_pad if self.sigmoid_output else 0,
                bytes_accessed=(int(x_pad.size) * c_isz + self._weight_bytes
                                + self._bias_bytes + m_pad * d_out_pad * o_isz))
            y_pad = _fused_mlp_call(x_pad, self.weights_p, self.biases_p,
                                    self.activations, tile_m=tile_m,
                                    out_dtype=out_dtype,
                                    vmem_limit_bytes=vmem, cost=cost)
        else:
            # Weights too large to keep resident: per-layer M/N/K-tiled matmuls.
            h_pad = x_pad
            for li, (w, b, act) in enumerate(zip(self.weights_p, self.biases_p,
                                                 self.activations)):
                last = li == self.num_layers - 1
                h_pad = _tiled_linear_call(
                    h_pad, w, b, act, tile_m=tile_m,
                    out_dtype=out_dtype if last else self.compute_dtype)
            y_pad = h_pad

        if m_pad == m and d_out_pad == self.output_dim:
            y = y_pad
        else:
            y = y_pad[:m, :self.output_dim]
        return y.reshape(*lead, self.output_dim)


# ---------------------------------------------------------------------------
# pure-JAX reference (mirrors the PyTorch forward exactly, in f32)
# ---------------------------------------------------------------------------

def _reference_mlp(mlp, x):
    lead = x.shape[:-1]
    x2 = x.reshape(-1, x.shape[-1]).astype(jnp.float32)
    for i, (w, b) in enumerate(mlp.params):
        x2 = x2 @ w.astype(jnp.float32).T + b.astype(jnp.float32)
        if i < mlp.num_layers - 1:
            x2 = jnp.maximum(x2, 0.0)
    if mlp.sigmoid_output:
        x2 = jax.nn.sigmoid(x2)
    return x2.reshape(*lead, x2.shape[-1])


if __name__ == "__main__":
    key = jax.random.PRNGKey(0)
    kx, kx2, kp = jax.random.split(key, 3)

    input_dim, hidden_dim, output_dim, num_layers = 32, 64, 16, 3

    # test 1: fused path, default bf16 compute, leading dims (2, 4) -> batch 8
    x = jax.random.normal(kx, (2, 4, input_dim), jnp.float32)
    mlp_bf16 = PallasMLP(input_dim, hidden_dim, output_dim, num_layers,
                         sigmoid_output=True, key=kp)
    out = jax.block_until_ready(mlp_bf16(x))
    ref = _reference_mlp(mlp_bf16, x)
    assert out.shape == (2, 4, output_dim)
    assert jnp.allclose(out, ref, atol=2e-2, rtol=2e-2), "fused bf16 mismatch"

    # test 2: fused path, f32 compute -> tight-tolerance check, batch 48
    x_big = jax.random.normal(kx2, (48, input_dim), jnp.float32)
    mlp_f32 = PallasMLP(input_dim, hidden_dim, output_dim, num_layers,
                        sigmoid_output=True, key=kp,
                        compute_dtype=jnp.float32)
    out_f32 = jax.block_until_ready(mlp_f32(x_big))
    ref_f32 = _reference_mlp(mlp_f32, x_big)
    assert jnp.allclose(out_f32, ref_f32, atol=1e-5, rtol=1e-5), \
        "fused f32 mismatch"

    # test 3: forced per-layer tiled fallback (bf16), batch 48
    mlp_tiled = PallasMLP(input_dim, hidden_dim, output_dim, num_layers,
                          sigmoid_output=True, key=kp, force_tiled=True)
    out_tiled = jax.block_until_ready(mlp_tiled(x_big))
    ref_tiled = _reference_mlp(mlp_tiled, x_big)
    assert jnp.allclose(out_tiled, ref_tiled, atol=2e-2, rtol=2e-2), \
        "tiled fallback mismatch"

    print("KERNEL_OK")
</pallas_src>

<mosaic_0001>
module attributes {stable_mosaic.version = 11 : i64} {
  func.func @_fused_mlp_kernel(%arg0: i32, %arg1: memref<16x128xbf16, #tpu.memory_space<vmem>>, %arg2: memref<128x128xbf16, #tpu.memory_space<vmem>>, %arg3: memref<1x128xf32, #tpu.memory_space<vmem>>, %arg4: memref<128x128xbf16, #tpu.memory_space<vmem>>, %arg5: memref<1x128xf32, #tpu.memory_space<vmem>>, %arg6: memref<128x128xbf16, #tpu.memory_space<vmem>>, %arg7: memref<1x128xf32, #tpu.memory_space<vmem>>, %arg8: memref<16x128xf32, #tpu.memory_space<vmem>>) attributes {dimension_semantics = [#tpu.dimension_semantics<parallel>], iteration_bounds = array<i64: 1>, scalar_prefetch = 0 : i64, scratch_operands = 0 : i64, tpu.core_type = #tpu.core_type<tc>, window_params = [{transform_indices = @transform_0, window_bounds = array<i64: 16, 128>}, {pipeline_mode = #tpu.pipeline_mode<synchronous>, transform_indices = @transform_1, window_bounds = array<i64: 128, 128>}, {pipeline_mode = #tpu.pipeline_mode<synchronous>, transform_indices = @transform_2, window_bounds = array<i64: 1, 128>}, {pipeline_mode = #tpu.pipeline_mode<synchronous>, transform_indices = @transform_3, window_bounds = array<i64: 128, 128>}, {pipeline_mode = #tpu.pipeline_mode<synchronous>, transform_indices = @transform_4, window_bounds = array<i64: 1, 128>}, {pipeline_mode = #tpu.pipeline_mode<synchronous>, transform_indices = @transform_5, window_bounds = array<i64: 128, 128>}, {pipeline_mode = #tpu.pipeline_mode<synchronous>, transform_indices = @transform_6, window_bounds = array<i64: 1, 128>}, {transform_indices = @transform_7, window_bounds = array<i64: 16, 128>}]} {
    %c0 = arith.constant 0 : index
    %c0_0 = arith.constant 0 : index
    %0 = vector.load %arg1[%c0, %c0_0] : memref<16x128xbf16, #tpu.memory_space<vmem>>, vector<16x128xbf16>
    %c0_1 = arith.constant 0 : index
    %c0_2 = arith.constant 0 : index
    %1 = vector.load %arg2[%c0_1, %c0_2] : memref<128x128xbf16, #tpu.memory_space<vmem>>, vector<128x128xbf16>
    %c0_3 = arith.constant 0 : index
    %c0_4 = arith.constant 0 : index
    %2 = vector.load %arg3[%c0_3, %c0_4] : memref<1x128xf32, #tpu.memory_space<vmem>>, vector<1x128xf32>
    %cst = arith.constant dense<0.000000e+00> : vector<16x128xf32>
    %3 = tpu.matmul %0, %1, %cst {dimension_numbers = #tpu.dot_dimension_numbers<[1], [0], [0], [1], [0, 0, 1, 1], [], []>} : vector<16x128xbf16>, vector<128x128xbf16>, vector<16x128xf32> -> vector<16x128xf32>
    %4 = vector.broadcast %2 : vector<1x128xf32> to vector<16x128xf32>
    %5 = arith.addf %3, %4 : vector<16x128xf32>
    %cst_5 = arith.constant 0.000000e+00 : f32
    %6 = vector.broadcast %cst_5 : f32 to vector<16x128xf32>
    %7 = arith.maximumf %5, %6 : vector<16x128xf32>
    %8 = arith.truncf %7 : vector<16x128xf32> to vector<16x128xbf16>
    %c0_6 = arith.constant 0 : index
    %c0_7 = arith.constant 0 : index
    %9 = vector.load %arg4[%c0_6, %c0_7] : memref<128x128xbf16, #tpu.memory_space<vmem>>, vector<128x128xbf16>
    %c0_8 = arith.constant 0 : index
    %c0_9 = arith.constant 0 : index
    %10 = vector.load %arg5[%c0_8, %c0_9] : memref<1x128xf32, #tpu.memory_space<vmem>>, vector<1x128xf32>
    %cst_10 = arith.constant dense<0.000000e+00> : vector<16x128xf32>
    %11 = tpu.matmul %8, %9, %cst_10 {dimension_numbers = #tpu.dot_dimension_numbers<[1], [0], [0], [1], [0, 0, 1, 1], [], []>} : vector<16x128xbf16>, vector<128x128xbf16>, vector<16x128xf32> -> vector<16x128xf32>
    %12 = vector.broadcast %10 : vector<1x128xf32> to vector<16x128xf32>
    %13 = arith.addf %11, %12 : vector<16x128xf32>
    %cst_11 = arith.constant 0.000000e+00 : f32
    %14 = vector.broadcast %cst_11 : f32 to vector<16x128xf32>
    %15 = arith.maximumf %13, %14 : vector<16x128xf32>
    %16 = arith.truncf %15 : vector<16x128xf32> to vector<16x128xbf16>
    %c0_12 = arith.constant 0 : index
    %c0_13 = arith.constant 0 : index
    %17 = vector.load %arg6[%c0_12, %c0_13] : memref<128x128xbf16, #tpu.memory_space<vmem>>, vector<128x128xbf16>
    %c0_14 = arith.constant 0 : index
    %c0_15 = arith.constant 0 : index
    %18 = vector.load %arg7[%c0_14, %c0_15] : memref<1x128xf32, #tpu.memory_space<vmem>>, vector<1x128xf32>
    %cst_16 = arith.constant dense<0.000000e+00> : vector<16x128xf32>
    %19 = tpu.matmul %16, %17, %cst_16 {dimension_numbers = #tpu.dot_dimension_numbers<[1], [0], [0], [1], [0, 0, 1, 1], [], []>} : vector<16x128xbf16>, vector<128x128xbf16>, vector<16x128xf32> -> vector<16x128xf32>
    %20 = vector.broadcast %18 : vector<1x128xf32> to vector<16x128xf32>
    %21 = arith.addf %19, %20 : vector<16x128xf32>
    %22 = arith.negf %21 : vector<16x128xf32>
    %23 = math.exp %22 : vector<16x128xf32>
    %cst_17 = arith.constant 1.000000e+00 : f32
    %24 = vector.broadcast %cst_17 : f32 to vector<16x128xf32>
    %25 = arith.addf %24, %23 : vector<16x128xf32>
    %26 = arith.divf %24, %25 : vector<16x128xf32>
    %c0_18 = arith.constant 0 : index
    %c0_19 = arith.constant 0 : index
    %27 = vector.load %arg8[%c0_18, %c0_19] : memref<16x128xf32, #tpu.memory_space<vmem>>, vector<16x128xf32>
    tpu.vector_store %arg8[%c0_18, %c0_19], %26 {strides = array<i32>} : memref<16x128xf32, #tpu.memory_space<vmem>>, vector<16x128xf32>,
    return
  }
  func.func @transform_0(%arg0: i32) -> (i32, i32) {
    %c0_i32 = arith.constant 0 : i32
    %c0_i32_0 = arith.constant 0 : i32
    return %arg0, %c0_i32 : i32, i32
  }
  func.func @transform_1(%arg0: i32) -> (i32, i32) {
    %c0_i32 = arith.constant 0 : i32
    %c0_i32_0 = arith.constant 0 : i32
    %c0_i32_1 = arith.constant 0 : i32
    return %c0_i32, %c0_i32_0 : i32, i32
  }
  func.func @transform_2(%arg0: i32) -> (i32, i32) {
    %c0_i32 = arith.constant 0 : i32
    %c0_i32_0 = arith.constant 0 : i32
    %c0_i32_1 = arith.constant 0 : i32
    return %c0_i32, %c0_i32_0 : i32, i32
  }
  func.func @transform_3(%arg0: i32) -> (i32, i32) {
    %c0_i32 = arith.constant 0 : i32
    %c0_i32_0 = arith.constant 0 : i32
    %c0_i32_1 = arith.constant 0 : i32
    return %c0_i32, %c0_i32_0 : i32, i32
  }
  func.func @transform_4(%arg0: i32) -> (i32, i32) {
    %c0_i32 = arith.constant 0 : i32
    %c0_i32_0 = arith.constant 0 : i32
    %c0_i32_1 = arith.constant 0 : i32
    return %c0_i32, %c0_i32_0 : i32, i32
  }
  func.func @transform_5(%arg0: i32) -> (i32, i32) {
    %c0_i32 = arith.constant 0 : i32
    %c0_i32_0 = arith.constant 0 : i32
    %c0_i32_1 = arith.constant 0 : i32
    return %c0_i32, %c0_i32_0 : i32, i32
  }
  func.func @transform_6(%arg0: i32) -> (i32, i32) {
    %c0_i32 = arith.constant 0 : i32
    %c0_i32_0 = arith.constant 0 : i32
    %c0_i32_1 = arith.constant 0 : i32
    return %c0_i32, %c0_i32_0 : i32, i32
  }
  func.func @transform_7(%arg0: i32) -> (i32, i32) {
    %c0_i32 = arith.constant 0 : i32
    %c0_i32_0 = arith.constant 0 : i32
    return %arg0, %c0_i32 : i32, i32
  }
}

</mosaic_0001>

<llo_original>
// kernel: tpu_custom_call.1
$region0: #{tpu_custom_call.1}
  #allocation0 [shape = 'u32[]', space=smem, size = 0x4, offset = 0x4, fixed_abs, tag = 'smem constant byte address 0x4 - core index']
  #allocation1 [shape = 'u32[144,128]{1,0:T(1,128)}', space=vmem, size = 0x12000, scoped, tag = 'internal scratch']
  %s0 = inlined_call_operand.hbm [shape: bf16[16,128], index: 0, kind: input, shape index: {}]
  %s1 = inlined_call_operand.hbm [shape: bf16[128,128], index: 1, kind: input, shape index: {}]
  %s2 = inlined_call_operand.vmem [shape: f32[1,128], index: 2, kind: input, shape index: {}]
  %s3 = inlined_call_operand.hbm [shape: bf16[128,128], index: 3, kind: input, shape index: {}]
  %s4 = inlined_call_operand.vmem [shape: f32[1,128], index: 4, kind: input, shape index: {}]
  %s5 = inlined_call_operand.hbm [shape: bf16[128,128], index: 5, kind: input, shape index: {}]
  %s6 = inlined_call_operand.vmem [shape: f32[1,128], index: 6, kind: input, shape index: {}]
  %s7 = inlined_call_operand.hbm [shape: f32[16,128], index: 7, kind: output, shape index: {}]
  %s8 = sld [smem:[#allocation0]]
  $region54: #{tpu_custom_call.1} parent=0
    _
  %s10 = ssub.s32 1, %s8
  %s11 = scalar_select 0, %s10, %s8
  $region1: #{tpu_custom_call.1} parent=0
    #allocation2 [shape = 'u8[4096]{0}', space=vmem, size = 0x1000, scoped, tag = 'input window, operand 0, single buffered']
    #allocation3 [shape = 's32[1]{0}', space=sflag, size = 0x4, scoped, tag = 'scoped memory for tpu_custom_call.1']
    #allocation4 [shape = 's32[1]{0}', space=sflag, size = 0x4, scoped, tag = 'scoped memory for tpu_custom_call.1']
    #allocation5 [shape = 'u8[32768]{0}', space=vmem, size = 0x8000, scoped, tag = 'input window, operand 1, single buffered']
    #allocation6 [shape = 's32[1]{0}', space=sflag, size = 0x4, scoped, tag = 'scoped memory for tpu_custom_call.1']
    #allocation7 [shape = 'u8[32768]{0}', space=vmem, size = 0x8000, scoped, tag = 'input window, operand 3, single buffered']
    #allocation8 [shape = 'u8[32768]{0}', space=vmem, size = 0x8000, scoped, tag = 'input window, operand 5, single buffered']
    #allocation9 [shape = 's32[1]{0}', space=sflag, size = 0x4, scoped, tag = 'scoped memory for tpu_custom_call.1']
    #allocation10 [shape = 'u8[8192]{0}', space=vmem, size = 0x2000, scoped, tag = 'output window, operand 0, single buffered']
    %12 = vsyncpa [#allocation3], 0
    %13 = vsyncpa [#allocation6], 0
    %14 = vsyncpa [#allocation9], 0
    %15 = vsyncpa [#allocation4], 0
    // Predicated region
    $region2: #{tpu_custom_call.1} parent=1 // pred_check
      _
    $region3: #{tpu_custom_call.1} parent=1 // pred_check_branch
      %17 = sbr.rel (0) target = $region5
    $region4: #{tpu_custom_call.1} parent=1 // pred_region
      %s19 = ssub.s32 128, 128
      %20 = vsyncadd [#allocation3], %s19
      %s21 = sshll.u32 [#allocation2], 4
      %s22 = int_to_ptr.vmem [resolvable:$true] %s21
      %27 = dma.hbm_to_vmem [thread:$0]  %s0, 128, %s22, [#allocation3], 64, 64, 4
    $region5: #{tpu_custom_call.1} parent=1 // pred_fallthru
      _
    // Predicated region
    $region6: #{tpu_custom_call.1} parent=1 // pred_check
      _
    $region7: #{tpu_custom_call.1} parent=1 // pred_check_branch
      %29 = sbr.rel (0) target = $region9
    $region8: #{tpu_custom_call.1} parent=1 // pred_region
      %s31 = ssub.s32 1024, 1024
      %32 = vsyncadd [#allocation6], %s31
      %s33 = sshll.u32 [#allocation5], 4
      %s34 = int_to_ptr.vmem [resolvable:$true] %s33
      %39 = dma.hbm_to_vmem [thread:$0]  %s1, 1024, %s34, [#allocation6], 64, 64, 4
    $region9: #{tpu_custom_call.1} parent=1 // pred_fallthru
      _
    // Predicated region
    $region10: #{tpu_custom_call.1} parent=1 // pred_check
      _
    $region11: #{tpu_custom_call.1} parent=1 // pred_check_branch
      %41 = sbr.rel (0) target = $region13
    $region12: #{tpu_custom_call.1} parent=1 // pred_region
      _
    $region13: #{tpu_custom_call.1} parent=1 // pred_fallthru
      _
    // Predicated region
    $region14: #{tpu_custom_call.1} parent=1 // pred_check
      _
    $region15: #{tpu_custom_call.1} parent=1 // pred_check_branch
      %43 = sbr.rel (0) target = $region17
    $region16: #{tpu_custom_call.1} parent=1 // pred_region
      %s45 = ssub.s32 1024, 1024
      %46 = vsyncadd [#allocation6], %s45
      %s47 = sshll.u32 [#allocation7], 4
      %s48 = int_to_ptr.vmem [resolvable:$true] %s47
      %53 = dma.hbm_to_vmem [thread:$0]  %s3, 1024, %s48, [#allocation6], 64, 64, 4
    $region17: #{tpu_custom_call.1} parent=1 // pred_fallthru
      _
    // Predicated region
    $region18: #{tpu_custom_call.1} parent=1 // pred_check
      _
    $region19: #{tpu_custom_call.1} parent=1 // pred_check_branch
      %55 = sbr.rel (0) target = $region21
    $region20: #{tpu_custom_call.1} parent=1 // pred_region
      _
    $region21: #{tpu_custom_call.1} parent=1 // pred_fallthru
      _
    // Predicated region
    $region22: #{tpu_custom_call.1} parent=1 // pred_check
      _
    $region23: #{tpu_custom_call.1} parent=1 // pred_check_branch
      %57 = sbr.rel (0) target = $region25
    $region24: #{tpu_custom_call.1} parent=1 // pred_region
      %s59 = ssub.s32 1024, 1024
      %60 = vsyncadd [#allocation9], %s59
      %s61 = sshll.u32 [#allocation8], 4
      %s62 = int_to_ptr.vmem [resolvable:$true] %s61
      %67 = dma.hbm_to_vmem [thread:$0]  %s5, 1024, %s62, [#allocation9], 64, 64, 4
    $region25: #{tpu_custom_call.1} parent=1 // pred_fallthru
      _
    // Predicated region
    $region26: #{tpu_custom_call.1} parent=1 // pred_check
      _
    $region27: #{tpu_custom_call.1} parent=1 // pred_check_branch
      %69 = sbr.rel (0) target = $region29
    $region28: #{tpu_custom_call.1} parent=1 // pred_region
      _
    $region29: #{tpu_custom_call.1} parent=1 // pred_fallthru
      _
    // Predicated region
    $region30: #{tpu_custom_call.1} parent=1 // pred_check
      _
    $region31: #{tpu_custom_call.1} parent=1 // pred_check_branch
      %71 = sbr.rel (0) target = $region33
    $region32: #{tpu_custom_call.1} parent=1 // pred_region
      %72 = dma.done [#allocation3], 128
    $region33: #{tpu_custom_call.1} parent=1 // pred_fallthru
      _
    // Predicated region
    $region34: #{tpu_custom_call.1} parent=1 // pred_check
      _
    $region35: #{tpu_custom_call.1} parent=1 // pred_check_branch
      %74 = sbr.rel (0) target = $region37
    $region36: #{tpu_custom_call.1} parent=1 // pred_region
      %75 = dma.done [#allocation6], 1024
    $region37: #{tpu_custom_call.1} parent=1 // pred_fallthru
      _
    // Predicated region
    $region38: #{tpu_custom_call.1} parent=1 // pred_check
      _
    $region39: #{tpu_custom_call.1} parent=1 // pred_check_branch
      %77 = sbr.rel (0) target = $region41
    $region40: #{tpu_custom_call.1} parent=1 // pred_region
      %78 = dma.done [#allocation6], 1024
    $region41: #{tpu_custom_call.1} parent=1 // pred_fallthru
      _
    // Predicated region
    $region42: #{tpu_custom_call.1} parent=1 // pred_check
      _
    $region43: #{tpu_custom_call.1} parent=1 // pred_check_branch
      %80 = sbr.rel (0) target = $region45
    $region44: #{tpu_custom_call.1} parent=1 // pred_region
      %81 = dma.done [#allocation9], 1024
    $region45: #{tpu_custom_call.1} parent=1 // pred_fallthru
      _
    %v83 = vld [vmem:[#allocation2] sm:$0xf]
    %v84 = vld [vmem:[#allocation2 + $0x4] sm:$0xf]
    %v85 = vld [vmem:[#allocation5] sm:$0xf]
    %v86 = vld [vmem:[#allocation5 + $0x4] sm:$0xf]
    %v87 = vld [vmem:[#allocation5 + $0x8] sm:$0xf]
    %v88 = vld [vmem:[#allocation5 + $0xc] sm:$0xf]
    %v89 = vld [vmem:[#allocation5 + $0x10] sm:$0xf]
    %v90 = vld [vmem:[#allocation5 + $0x14] sm:$0xf]
    %v91 = vld [vmem:[#allocation5 + $0x18] sm:$0xf]
    %v92 = vld [vmem:[#allocation5 + $0x1c] sm:$0xf]
    %v93 = vld [vmem:[#allocation5 + $0x20] sm:$0xf]
    %v94 = vld [vmem:[#allocation5 + $0x24] sm:$0xf]
    %v95 = vld [vmem:[#allocation5 + $0x28] sm:$0xf]
    %v96 = vld [vmem:[#allocation5 + $0x2c] sm:$0xf]
    %v97 = vld [vmem:[#allocation5 + $0x30] sm:$0xf]
    %v98 = vld [vmem:[#allocation5 + $0x34] sm:$0xf]
    %v99 = vld [vmem:[#allocation5 + $0x38] sm:$0xf]
    %v100 = vld [vmem:[#allocation5 + $0x3c] sm:$0xf]
    %v101 = vld [vmem:[%s2] sm:$0x1]
    %v103 = vlaneseq
    %v104 = vshrl.u32 %v103, 7
    %v105 = vsub.s32 0, %v104
    %v106 = vrot.slane %v101, %v105
    %v110 = vunpack.c.l.b16 %v83
    %v111 = vunpack.c.l.b16 %v84
    %v112 = vpack.c.b16 %v111, %v110
    %v130 = vunpack.c.l.b16 %v85
    %v131 = vunpack.c.l.b16 %v86
    %v132 = vunpack.c.l.b16 %v87
    %v133 = vunpack.c.l.b16 %v88
    %v134 = vunpack.c.l.b16 %v89
    %v135 = vunpack.c.l.b16 %v90
    %v136 = vunpack.c.l.b16 %v91
    %v137 = vunpack.c.l.b16 %v92
    %v138 = vunpack.c.l.b16 %v93
    %v139 = vunpack.c.l.b16 %v94
    %v140 = vunpack.c.l.b16 %v95
    %v141 = vunpack.c.l.b16 %v96
    %v142 = vunpack.c.l.b16 %v97
    %v143 = vunpack.c.l.b16 %v98
    %v144 = vunpack.c.l.b16 %v99
    %v145 = vunpack.c.l.b16 %v100
    %v146 = vpack.c.b16 %v131, %v130
    %v147 = vpack.c.b16 %v133, %v132
    %v148 = vpack.c.b16 %v135, %v134
    %v149 = vpack.c.b16 %v137, %v136
    %v150 = vpack.c.b16 %v139, %v138
    %v151 = vpack.c.b16 %v141, %v140
    %v152 = vpack.c.b16 %v143, %v142
    %v153 = vpack.c.b16 %v145, %v144
    %162 = vmatprep.subr.bf16.mxu0 0
    %163 = vmatpush1.bf16.msra.mxu0 %v146
    %164 = vmatprep.subr.bf16.mxu0 0
    %165 = vmatpush1.bf16.msra.mxu0 %v147
    %166 = vmatprep.subr.bf16.mxu0 0
    %167 = vmatpush1.bf16.msra.mxu0 %v148
    %168 = vmatprep.subr.bf16.mxu0 0
    %169 = vmatpush1.bf16.msra.mxu0 %v149
    %170 = vmatprep.subr.bf16.mxu0 0
    %171 = vmatpush1.bf16.msra.mxu0 %v150
    %172 = vmatprep.subr.bf16.mxu0 0
    %173 = vmatpush1.bf16.msra.mxu0 %v151
    %174 = vmatprep.subr.bf16.mxu0 0
    %175 = vmatpush1.bf16.msra.mxu0 %v152
    %176 = vmatprep.subr.bf16.mxu0 0
    %177 = vmatpush1.bf16.msra.mxu0 %v153
    %178 = vmatprep.subr.bf16.mxu0 0
    %179 = vmatpush1.bf16.msra.mxu0 0
    %180 = vmatprep.subr.bf16.mxu0 0
    %181 = vmatpush1.bf16.msra.mxu0 0
    %182 = vmatprep.subr.bf16.mxu0 0
    %183 = vmatpush1.bf16.msra.mxu0 0
    %184 = vmatprep.subr.bf16.mxu0 0
    %185 = vmatpush1.bf16.msra.mxu0 0
    %186 = vmatprep.subr.bf16.mxu0 0
    %187 = vmatpush1.bf16.msra.mxu0 0
    %188 = vmatprep.subr.bf16.mxu0 0
    %189 = vmatpush1.bf16.msra.mxu0 0
    %190 = vmatprep.subr.bf16.mxu0 0
    %191 = vmatpush1.bf16.msra.mxu0 0
    %192 = vmatprep.subr.bf16.mxu0 0
    %193 = vmatpush1.bf16.msra.mxu0 0
    %194 = vmatprep.mubr.bf16.mxu0 0
    %195 = vmatmul.mubr.bf16.gmra.mrb[0].mxu0 %v112
    %v196 = vpop.f32.mrb[0].mxu0
    %v197 = vadd.f32 %v106, %v196
    %v198 = vpop.f32.mrb[0].mxu0
    %v199 = vpop.f32.mrb[0].mxu0
    %v200 = vadd.f32 %v106, %v199
    %v201 = vpop.f32.mrb[0].mxu0
    %202 = vdwg.mxu0
    %v203 = vmax.f32 %v197, 0.0
    %v204 = vmax.f32 %v200, 0.0
    %v205 = vpack.c.bf16 %v204, %v203
    %v206 = vld [vmem:[#allocation7] sm:$0xf]
    %v207 = vld [vmem:[#allocation7 + $0x4] sm:$0xf]
    %v208 = vld [vmem:[#allocation7 + $0x8] sm:$0xf]
    %v209 = vld [vmem:[#allocation7 + $0xc] sm:$0xf]
    %v210 = vld [vmem:[#allocation7 + $0x10] sm:$0xf]
    %v211 = vld [vmem:[#allocation7 + $0x14] sm:$0xf]
    %v212 = vld [vmem:[#allocation7 + $0x18] sm:$0xf]
    %v213 = vld [vmem:[#allocation7 + $0x1c] sm:$0xf]
    %v214 = vld [vmem:[#allocation7 + $0x20] sm:$0xf]
    %v215 = vld [vmem:[#allocation7 + $0x24] sm:$0xf]
    %v216 = vld [vmem:[#allocation7 + $0x28] sm:$0xf]
    %v217 = vld [vmem:[#allocation7 + $0x2c] sm:$0xf]
    %v218 = vld [vmem:[#allocation7 + $0x30] sm:$0xf]
    %v219 = vld [vmem:[#allocation7 + $0x34] sm:$0xf]
    %v220 = vld [vmem:[#allocation7 + $0x38] sm:$0xf]
    %v221 = vld [vmem:[#allocation7 + $0x3c] sm:$0xf]
    %v222 = vld [vmem:[%s4] sm:$0x1]
    %v224 = vlaneseq
    %v225 = vshrl.u32 %v224, 7
    %v226 = vsub.s32 0, %v225
    %v227 = vrot.slane %v222, %v226
    %v245 = vunpack.c.l.b16 %v206
    %v246 = vunpack.c.l.b16 %v207
    %v247 = vunpack.c.l.b16 %v208
    %v248 = vunpack.c.l.b16 %v209
    %v249 = vunpack.c.l.b16 %v210
    %v250 = vunpack.c.l.b16 %v211
    %v251 = vunpack.c.l.b16 %v212
    %v252 = vunpack.c.l.b16 %v213
    %v253 = vunpack.c.l.b16 %v214
    %v254 = vunpack.c.l.b16 %v215
    %v255 = vunpack.c.l.b16 %v216
    %v256 = vunpack.c.l.b16 %v217
    %v257 = vunpack.c.l.b16 %v218
    %v258 = vunpack.c.l.b16 %v219
    %v259 = vunpack.c.l.b16 %v220
    %v260 = vunpack.c.l.b16 %v221
    %v261 = vpack.c.b16 %v246, %v245
    %v262 = vpack.c.b16 %v248, %v247
    %v263 = vpack.c.b16 %v250, %v249
    %v264 = vpack.c.b16 %v252, %v251
    %v265 = vpack.c.b16 %v254, %v253
    %v266 = vpack.c.b16 %v256, %v255
    %v267 = vpack.c.b16 %v258, %v257
    %v268 = vpack.c.b16 %v260, %v259
    %277 = vmatprep.subr.bf16.mxu0 0
    %278 = vmatpush1.bf16.msra.mxu0 %v261
    %279 = vmatprep.subr.bf16.mxu0 0
    %280 = vmatpush1.bf16.msra.mxu0 %v262
    %281 = vmatprep.subr.bf16.mxu0 0
    %282 = vmatpush1.bf16.msra.mxu0 %v263
    %283 = vmatprep.subr.bf16.mxu0 0
    %284 = vmatpush1.bf16.msra.mxu0 %v264
    %285 = vmatprep.subr.bf16.mxu0 0
    %286 = vmatpush1.bf16.msra.mxu0 %v265
    %287 = vmatprep.subr.bf16.mxu0 0
    %288 = vmatpush1.bf16.msra.mxu0 %v266
    %289 = vmatprep.subr.bf16.mxu0 0
    %290 = vmatpush1.bf16.msra.mxu0 %v267
    %291 = vmatprep.subr.bf16.mxu0 0
    %292 = vmatpush1.bf16.msra.mxu0 %v268
    %293 = vmatprep.subr.bf16.mxu0 0
    %294 = vmatpush1.bf16.msra.mxu0 0
    %295 = vmatprep.subr.bf16.mxu0 0
    %296 = vmatpush1.bf16.msra.mxu0 0
    %297 = vmatprep.subr.bf16.mxu0 0
    %298 = vmatpush1.bf16.msra.mxu0 0
    %299 = vmatprep.subr.bf16.mxu0 0
    %300 = vmatpush1.bf16.msra.mxu0 0
    %301 = vmatprep.subr.bf16.mxu0 0
    %302 = vmatpush1.bf16.msra.mxu0 0
    %303 = vmatprep.subr.bf16.mxu0 0
    %304 = vmatpush1.bf16.msra.mxu0 0
    %305 = vmatprep.subr.bf16.mxu0 0
    %306 = vmatpush1.bf16.msra.mxu0 0
    %307 = vmatprep.subr.bf16.mxu0 0
    %308 = vmatpush1.bf16.msra.mxu0 0
    %309 = vmatprep.mubr.bf16.mxu0 0
    %310 = vmatmul.mubr.bf16.gmra.mrb[0].mxu0 %v205
    %v311 = vpop.f32.mrb[0].mxu0
    %v312 = vadd.f32 %v227, %v311
    %v313 = vpop.f32.mrb[0].mxu0
    %v314 = vpop.f32.mrb[0].mxu0
    %v315 = vadd.f32 %v227, %v314
    %v316 = vpop.f32.mrb[0].mxu0
    %317 = vdwg.mxu0
    %v318 = vmax.f32 %v312, 0.0
    %v319 = vmax.f32 %v315, 0.0
    %v320 = vpack.c.bf16 %v319, %v318
    %v321 = vld [vmem:[#allocation8] sm:$0xf]
    %v322 = vld [vmem:[#allocation8 + $0x4] sm:$0xf]
    %v323 = vld [vmem:[#allocation8 + $0x8] sm:$0xf]
    %v324 = vld [vmem:[#allocation8 + $0xc] sm:$0xf]
    %v325 = vld [vmem:[#allocation8 + $0x10] sm:$0xf]
    %v326 = vld [vmem:[#allocation8 + $0x14] sm:$0xf]
    %v327 = vld [vmem:[#allocation8 + $0x18] sm:$0xf]
    %v328 = vld [vmem:[#allocation8 + $0x1c] sm:$0xf]
    %v329 = vld [vmem:[#allocation8 + $0x20] sm:$0xf]
    %v330 = vld [vmem:[#allocation8 + $0x24] sm:$0xf]
    %v331 = vld [vmem:[#allocation8 + $0x28] sm:$0xf]
    %v332 = vld [vmem:[#allocation8 + $0x2c] sm:$0xf]
    %v333 = vld [vmem:[#allocation8 + $0x30] sm:$0xf]
    %v334 = vld [vmem:[#allocation8 + $0x34] sm:$0xf]
    %v335 = vld [vmem:[#allocation8 + $0x38] sm:$0xf]
    %v336 = vld [vmem:[#allocation8 + $0x3c] sm:$0xf]
    %v337 = vld [vmem:[%s6] sm:$0x1]
    %v339 = vlaneseq
    %v340 = vshrl.u32 %v339, 7
    %v341 = vsub.s32 0, %v340
    %v342 = vrot.slane %v337, %v341
    %v360 = vunpack.c.l.b16 %v321
    %v361 = vunpack.c.l.b16 %v322
    %v362 = vunpack.c.l.b16 %v323
    %v363 = vunpack.c.l.b16 %v324
    %v364 = vunpack.c.l.b16 %v325
    %v365 = vunpack.c.l.b16 %v326
    %v366 = vunpack.c.l.b16 %v327
    %v367 = vunpack.c.l.b16 %v328
    %v368 = vunpack.c.l.b16 %v329
    %v369 = vunpack.c.l.b16 %v330
    %v370 = vunpack.c.l.b16 %v331
    %v371 = vunpack.c.l.b16 %v332
    %v372 = vunpack.c.l.b16 %v333
    %v373 = vunpack.c.l.b16 %v334
    %v374 = vunpack.c.l.b16 %v335
    %v375 = vunpack.c.l.b16 %v336
    %v376 = vpack.c.b16 %v361, %v360
    %v377 = vpack.c.b16 %v363, %v362
    %v378 = vpack.c.b16 %v365, %v364
    %v379 = vpack.c.b16 %v367, %v366
    %v380 = vpack.c.b16 %v369, %v368
    %v381 = vpack.c.b16 %v371, %v370
    %v382 = vpack.c.b16 %v373, %v372
    %v383 = vpack.c.b16 %v375, %v374
    %392 = vmatprep.subr.bf16.mxu0 0
    %393 = vmatpush1.bf16.msra.mxu0 %v376
    %394 = vmatprep.subr.bf16.mxu0 0
    %395 = vmatpush1.bf16.msra.mxu0 %v377
    %396 = vmatprep.subr.bf16.mxu0 0
    %397 = vmatpush1.bf16.msra.mxu0 %v378
    %398 = vmatprep.subr.bf16.mxu0 0
    %399 = vmatpush1.bf16.msra.mxu0 %v379
    %400 = vmatprep.subr.bf16.mxu0 0
    %401 = vmatpush1.bf16.msra.mxu0 %v380
    %402 = vmatprep.subr.bf16.mxu0 0
    %403 = vmatpush1.bf16.msra.mxu0 %v381
    %404 = vmatprep.subr.bf16.mxu0 0
    %405 = vmatpush1.bf16.msra.mxu0 %v382
    %406 = vmatprep.subr.bf16.mxu0 0
    %407 = vmatpush1.bf16.msra.mxu0 %v383
    %408 = vmatprep.subr.bf16.mxu0 0
    %409 = vmatpush1.bf16.msra.mxu0 0
    %410 = vmatprep.subr.bf16.mxu0 0
    %411 = vmatpush1.bf16.msra.mxu0 0
    %412 = vmatprep.subr.bf16.mxu0 0
    %413 = vmatpush1.bf16.msra.mxu0 0
    %414 = vmatprep.subr.bf16.mxu0 0
    %415 = vmatpush1.bf16.msra.mxu0 0
    %416 = vmatprep.subr.bf16.mxu0 0
    %417 = vmatpush1.bf16.msra.mxu0 0
    %418 = vmatprep.subr.bf16.mxu0 0
    %419 = vmatpush1.bf16.msra.mxu0 0
    %420 = vmatprep.subr.bf16.mxu0 0
    %421 = vmatpush1.bf16.msra.mxu0 0
    %422 = vmatprep.subr.bf16.mxu0 0
    %423 = vmatpush1.bf16.msra.mxu0 0
    %424 = vmatprep.mubr.bf16.mxu0 0
    %425 = vmatmul.mubr.bf16.gmra.mrb[0].mxu0 %v320
    %v426 = vpop.f32.mrb[0].mxu0
    %v427 = vadd.f32 %v342, %v426
    %v428 = vpop.f32.mrb[0].mxu0
    %v429 = vpop.f32.mrb[0].mxu0
    %v430 = vadd.f32 %v342, %v429
    %v431 = vpop.f32.mrb[0].mxu0
    %432 = vdwg.mxu0
    %v433 = vxor.u32 %v427, 2147483648
    %v434 = vxor.u32 %v430, 2147483648
    %v435 = vmul.f32 %v433, 1.442695
    %v436 = vpow.pop %v435
    %v437 = vmul.f32 %v434, 1.442695
    %v438 = vpow.pop %v437
    %v439 = vadd.f32 %v436, 1.0
    %v440 = vadd.f32 %v438, 1.0
    %v441 = vrcp.pop %v439
    %v442 = vmul.f32 1.0, %v441
    %v443 = vrcp.pop %v440
    %v444 = vmul.f32 1.0, %v443
    %445 = vst [vmem:[#allocation10] sm:$0xff] %v442
    %446 = vst [vmem:[#allocation10 + $0x8] sm:$0xff] %v444
    // Predicated region
    $region46: #{tpu_custom_call.1} parent=1 // pred_check
      _
    $region47: #{tpu_custom_call.1} parent=1 // pred_check_branch
      %448 = sbr.rel (0) target = $region49
    $region48: #{tpu_custom_call.1} parent=1 // pred_region
      %s450 = ssub.s32 256, 256
      %451 = vsyncadd [#allocation4], %s450
      %s452 = sshll.u32 [#allocation10], 4
      %s453 = int_to_ptr.vmem [resolvable:$true] %s452
      %458 = dma.vmem_to_hbm [thread:$0]  %s453, 256, %s7, [#allocation4], 128, 128, 8
    $region49: #{tpu_custom_call.1} parent=1 // pred_fallthru
      _
    // Predicated region
    $region50: #{tpu_custom_call.1} parent=1 // pred_check
      _
    $region51: #{tpu_custom_call.1} parent=1 // pred_check_branch
      %460 = sbr.rel (0) target = $region53
    $region52: #{tpu_custom_call.1} parent=1 // pred_region
      %461 = dma.done [#allocation4], 256
    $region53: #{tpu_custom_call.1} parent=1 // pred_fallthru
      _
    %462 = vsyncpa [#allocation3], 1
    %463 = vsyncpa [#allocation6], 1
    %464 = vsyncpa [#allocation9], 1
    %465 = vsyncpa [#allocation4], 1

</llo_original>
